<compile_context>
chip_gen: v7x
topology: tpu7x:2x2x1
jax: 0.10.0
libtpu: 0.0.40
codegen_flags: <defaults>
</compile_context>

<pallas_src>
import functools

import jax
import jax.numpy as jnp
from jax import lax
from jax.experimental import pallas as pl
from jax.experimental.pallas import tpu as pltpu

# ---- mini BERT config (bert-base-chinese structure at small, lane-dense sizes) ----
# Real bert-base: hidden=768=12*64, intermediate=3072, 12 layers.
# Mini:           hidden=128= 2*64, intermediate=512,  2 layers.
VOCAB = 128
HIDDEN = 128
N_LAYERS = 2
N_HEADS = 2
HEAD_DIM = HIDDEN // N_HEADS           # 64 — same head_dim as real bert-base
INTERMEDIATE = 4 * HIDDEN              # 512
MAX_POS = 128
TYPE_VOCAB = 2
LN_EPS = 1e-12


# ----------------------------- in-kernel helpers -----------------------------

def _layernorm(x, gamma, beta):
    # x: (S, H) f32 ; gamma/beta: (1, H) f32
    mu = jnp.mean(x, axis=-1, keepdims=True)
    xc = x - mu
    var = jnp.mean(xc * xc, axis=-1, keepdims=True)
    return xc * lax.rsqrt(var + LN_EPS) * gamma + beta


def _gelu_erf(x):
    # Exact BERT (erf-form) GELU in f32.
    # TODO(synk): tanh-approx GELU would route to the otherwise-idle EUP slot while
    # the down-projection owns the MXU, at a small numeric deviation.
    return 0.5 * x * (1.0 + lax.erf(x * 0.7071067811865476))


# ----------------------------- Pallas kernels -----------------------------

def _emb_ln_kernel(x_ref, g_ref, b_ref, o_ref):
    # Embedding LayerNorm (no residual).  bf16 in / bf16 out, f32 math.
    x = x_ref[...].astype(jnp.float32)
    o_ref[...] = _layernorm(x, g_ref[...], b_ref[...]).astype(o_ref.dtype)


def emb_layernorm(x, gamma, beta, *, batch, seq):
    m, h = x.shape
    return pl.pallas_call(
        _emb_ln_kernel,
        out_shape=jax.ShapeDtypeStruct((m, h), jnp.bfloat16),
        grid=(batch,),
        in_specs=[
            pl.BlockSpec((seq, h), lambda i: (i, 0)),
            pl.BlockSpec((1, h), lambda i: (0, 0)),
            pl.BlockSpec((1, h), lambda i: (0, 0)),
        ],
        out_specs=pl.BlockSpec((seq, h), lambda i: (i, 0)),
        compiler_params=pltpu.CompilerParams(dimension_semantics=("parallel",)),
    )(x, gamma, beta)


def _layer_kernel(h_ref, m_ref, wqkv_ref, bqkv_ref, wo_ref, bo_ref,
                  g1_ref, b1_ref, wi_ref, bi_ref, wf_ref, bf_ref,
                  g2_ref, b2_ref, o_ref, ctx_ref, *, n_heads, head_dim):
    # One full encoder layer per grid step (one batch element, all S rows):
    #   fused QKV -> all-heads attention -> single wo matmul -> add&LN
    #   -> up-proj -> erf-GELU -> down-proj -> add&LN
    S, H = h_ref.shape
    x16 = h_ref[...]                                    # bf16 (S, H) activations

    # Fused QKV projection: one lane-dense (S,H)@(H,3H) MXU op.
    # Q weights/bias were pre-scaled by 1/sqrt(head_dim) in init_params.
    qkv = jnp.dot(x16, wqkv_ref[...],
                  preferred_element_type=jnp.float32) + bqkv_ref[...]
    q = qkv[:, :H]                                      # splits at 128-multiples
    k = qkv[:, H:2 * H]
    v = qkv[:, 2 * H:]

    add_mask = m_ref[...]                               # (1, S) additive mask

    # Per-head attention; each head's context is written into the (S, H) VMEM
    # scratch at its lane offset so the output projection is ONE K=H matmul.
    # TODO(synk): at 12 heads convert to lax.fori_loop(..., unroll=True); at
    # S>=512 tile the KV axis flash-style instead of a full (S,S) score tile.
    for hh in range(n_heads):
        sl = pl.ds(hh * head_dim, head_dim)
        qh = q[:, hh * head_dim:(hh + 1) * head_dim].astype(jnp.bfloat16)
        kh = k[:, hh * head_dim:(hh + 1) * head_dim].astype(jnp.bfloat16)
        vh = v[:, hh * head_dim:(hh + 1) * head_dim].astype(jnp.bfloat16)
        # Contract the feature dim directly — no k.T transpose emitted.
        scores = lax.dot_general(qh, kh, (((1,), (1,)), ((), ())),
                                 preferred_element_type=jnp.float32)
        scores = scores + add_mask
        scores = scores - jnp.max(scores, axis=-1, keepdims=True)
        p = jnp.exp(scores)
        p = p * pl.reciprocal(jnp.sum(p, axis=-1, keepdims=True), approx=True)
        ctx_ref[:, sl] = jnp.dot(p.astype(jnp.bfloat16), vh,
                                 preferred_element_type=jnp.float32
                                 ).astype(jnp.bfloat16)

    # Single K=H output projection + residual + LayerNorm (f32 math).
    attn = jnp.dot(ctx_ref[...], wo_ref[...],
                   preferred_element_type=jnp.float32) + bo_ref[...]
    y1 = _layernorm(attn + x16.astype(jnp.float32), g1_ref[...], b1_ref[...])

    # FFN: up-proj + erf-GELU + down-proj + residual + LayerNorm, all in-VMEM.
    u = jnp.dot(y1.astype(jnp.bfloat16), wi_ref[...],
                preferred_element_type=jnp.float32) + bi_ref[...]
    u = _gelu_erf(u)
    d = jnp.dot(u.astype(jnp.bfloat16), wf_ref[...],
                preferred_element_type=jnp.float32) + bf_ref[...]
    o_ref[...] = _layernorm(d + y1, g2_ref[...], b2_ref[...]).astype(o_ref.dtype)


def encoder_layer(h, add_mask, lp, *, batch, seq):
    m, hd = h.shape
    inter = lp["wi"].shape[1]
    kernel = functools.partial(_layer_kernel, n_heads=N_HEADS, head_dim=HEAD_DIM)
    return pl.pallas_call(
        kernel,
        out_shape=jax.ShapeDtypeStruct((m, hd), jnp.bfloat16),
        grid=(batch,),
        in_specs=[
            pl.BlockSpec((seq, hd), lambda i: (i, 0)),                    # hidden rows
            pl.BlockSpec((pl.Squeezed(), 1, seq), lambda i: (i, 0, 0)),   # add. mask
            pl.BlockSpec((hd, 3 * hd), lambda i: (0, 0)),                 # wqkv
            pl.BlockSpec((1, 3 * hd), lambda i: (0, 0)),                  # bqkv
            pl.BlockSpec((hd, hd), lambda i: (0, 0)),                     # wo
            pl.BlockSpec((1, hd), lambda i: (0, 0)),                      # bo
            pl.BlockSpec((1, hd), lambda i: (0, 0)),                      # ln1 gamma
            pl.BlockSpec((1, hd), lambda i: (0, 0)),                      # ln1 beta
            pl.BlockSpec((hd, inter), lambda i: (0, 0)),                  # wi
            pl.BlockSpec((1, inter), lambda i: (0, 0)),                   # bi
            pl.BlockSpec((inter, hd), lambda i: (0, 0)),                  # wf
            pl.BlockSpec((1, hd), lambda i: (0, 0)),                      # bf
            pl.BlockSpec((1, hd), lambda i: (0, 0)),                      # ln2 gamma
            pl.BlockSpec((1, hd), lambda i: (0, 0)),                      # ln2 beta
        ],
        out_specs=pl.BlockSpec((seq, hd), lambda i: (i, 0)),
        scratch_shapes=[pltpu.VMEM((seq, hd), jnp.bfloat16)],             # per-head ctx
        compiler_params=pltpu.CompilerParams(dimension_semantics=("parallel",)),
    )(h, add_mask, lp["wqkv"], lp["bqkv"], lp["wo"], lp["bo"],
      lp["ln1_g"], lp["ln1_b"], lp["wi"], lp["bi"], lp["wf"], lp["bf"],
      lp["ln2_g"], lp["ln2_b"])


# ----------------------------- parameters -----------------------------

def init_params(key):
    # TODO(synk): original module loads a pretrained checkpoint (from_pretrained);
    # here weights are deterministic random (N(0, 0.02)) with the same structure.
    def init(k, shape, scale=0.02):
        return scale * jax.random.normal(k, shape, jnp.float32)

    keys = iter(jax.random.split(key, 4 + 6 * N_LAYERS))
    inv_sqrt_dh = 1.0 / (HEAD_DIM ** 0.5)

    params = {
        "word_emb": init(next(keys), (VOCAB, HIDDEN)),
        "pos_emb": init(next(keys), (MAX_POS, HIDDEN)),
        "type_emb": init(next(keys), (TYPE_VOCAB, HIDDEN)),
        "emb_ln_g": jnp.ones((1, HIDDEN), jnp.float32),
        "emb_ln_b": jnp.zeros((1, HIDDEN), jnp.float32),
        "layers": [],
    }
    for _ in range(N_LAYERS):
        wq = init(next(keys), (HIDDEN, HIDDEN))
        wk = init(next(keys), (HIDDEN, HIDDEN))
        wv = init(next(keys), (HIDDEN, HIDDEN))
        wo = init(next(keys), (HIDDEN, HIDDEN))
        wi = init(next(keys), (HIDDEN, INTERMEDIATE))
        wf = init(next(keys), (INTERMEDIATE, HIDDEN))
        bq = jnp.zeros((HIDDEN,), jnp.float32)
        bk = jnp.zeros((HIDDEN,), jnp.float32)
        bv = jnp.zeros((HIDDEN,), jnp.float32)
        # Fuse Q/K/V projections; fold the 1/sqrt(head_dim) attention scale into Q
        # (scale bq too, so nonzero query biases from real checkpoints stay exact).
        wqkv = jnp.concatenate([wq * inv_sqrt_dh, wk, wv], axis=1)
        bqkv = jnp.concatenate([bq * inv_sqrt_dh, bk, bv]).reshape(1, 3 * HIDDEN)
        layer = {
            # matmul weights live in bf16 (native MXU input), biases / LN in f32
            "wqkv": wqkv.astype(jnp.bfloat16),
            "bqkv": bqkv,
            "wo": wo.astype(jnp.bfloat16),
            "bo": jnp.zeros((1, HIDDEN), jnp.float32),
            "ln1_g": jnp.ones((1, HIDDEN), jnp.float32),
            "ln1_b": jnp.zeros((1, HIDDEN), jnp.float32),
            "wi": wi.astype(jnp.bfloat16),
            "bi": jnp.zeros((1, INTERMEDIATE), jnp.float32),
            "wf": wf.astype(jnp.bfloat16),
            "bf": jnp.zeros((1, HIDDEN), jnp.float32),
            "ln2_g": jnp.ones((1, HIDDEN), jnp.float32),
            "ln2_b": jnp.zeros((1, HIDDEN), jnp.float32),
        }
        params["layers"].append(layer)
    return params


# ----------------------------- forward pass -----------------------------

def bert_forward(params, input_ids, attention_mask):
    """Returns last encoder layer hidden states, shape (B, S, HIDDEN), f32."""
    b, s = input_ids.shape

    # Embeddings (gathers are plain-JAX glue); token_type_ids default to zeros,
    # dropout is an inference no-op.
    pos_ids = jnp.arange(s, dtype=jnp.int32)
    emb = (params["word_emb"][input_ids]
           + params["pos_emb"][pos_ids][None, :, :]
           + params["type_emb"][jnp.zeros((b, s), jnp.int32)])
    # Activations are carried between pallas_calls in bf16; LN/softmax math is f32.
    h = emb.reshape(b * s, HIDDEN).astype(jnp.bfloat16)
    h = emb_layernorm(h, params["emb_ln_g"], params["emb_ln_b"], batch=b, seq=s)

    # Extended additive attention mask: (1 - mask) * -10000, shape (B, 1, S).
    add_mask = ((1.0 - attention_mask.astype(jnp.float32)) * -10000.0).reshape(b, 1, s)

    for lp in params["layers"]:
        h = encoder_layer(h, add_mask, lp, batch=b, seq=s)

    return h.reshape(b, s, HIDDEN).astype(jnp.float32)


# ----------------------------- main -----------------------------

if __name__ == "__main__":
    key = jax.random.PRNGKey(0)
    pkey, ikey = jax.random.split(key)
    params = init_params(pkey)

    B, S = 2, 128
    input_ids = jax.random.randint(ikey, (B, S), 0, VOCAB, dtype=jnp.int32)
    attention_mask = jnp.ones((B, S), jnp.int32).at[1, 96:].set(0)  # pad tail of sample 1

    out = bert_forward(params, input_ids, attention_mask)
    out = jax.block_until_ready(out)

    assert out.shape == (B, S, HIDDEN), out.shape
    assert out.dtype == jnp.float32
    assert bool(jnp.all(jnp.isfinite(out)))
    print("KERNEL_OK")
</pallas_src>

<mosaic_0001>
module attributes {stable_mosaic.version = 11 : i64} {
  func.func @_emb_ln_kernel(%arg0: i32, %arg1: memref<128x128xbf16, #tpu.memory_space<vmem>>, %arg2: memref<1x128xf32, #tpu.memory_space<vmem>>, %arg3: memref<1x128xf32, #tpu.memory_space<vmem>>, %arg4: memref<128x128xbf16, #tpu.memory_space<vmem>>) attributes {dimension_semantics = [#tpu.dimension_semantics<parallel>], iteration_bounds = array<i64: 2>, scalar_prefetch = 0 : i64, scratch_operands = 0 : i64, tpu.core_type = #tpu.core_type<tc>, window_params = [{transform_indices = @transform_0, window_bounds = array<i64: 128, 128>}, {pipeline_mode = #tpu.pipeline_mode<synchronous>, transform_indices = @transform_1, window_bounds = array<i64: 1, 128>}, {pipeline_mode = #tpu.pipeline_mode<synchronous>, transform_indices = @transform_2, window_bounds = array<i64: 1, 128>}, {transform_indices = @transform_3, window_bounds = array<i64: 128, 128>}]} {
    %c0 = arith.constant 0 : index
    %c0_0 = arith.constant 0 : index
    %0 = vector.load %arg1[%c0, %c0_0] : memref<128x128xbf16, #tpu.memory_space<vmem>>, vector<128x128xbf16>
    %1 = arith.extf %0 : vector<128x128xbf16> to vector<128x128xf32>
    %c0_1 = arith.constant 0 : index
    %c0_2 = arith.constant 0 : index
    %2 = vector.load %arg2[%c0_1, %c0_2] : memref<1x128xf32, #tpu.memory_space<vmem>>, vector<1x128xf32>
    %c0_3 = arith.constant 0 : index
    %c0_4 = arith.constant 0 : index
    %3 = vector.load %arg3[%c0_3, %c0_4] : memref<1x128xf32, #tpu.memory_space<vmem>>, vector<1x128xf32>
    %cst = arith.constant dense<0.000000e+00> : vector<128xf32>
    %4 = vector.multi_reduction <add>, %1, %cst [1] : vector<128x128xf32> to vector<128xf32>
    %5 = vector.shape_cast %4 : vector<128xf32> to vector<128x1xf32>
    %cst_5 = arith.constant 1.280000e+02 : f32
    %6 = vector.broadcast %cst_5 : f32 to vector<128x1xf32>
    %7 = arith.divf %5, %6 : vector<128x1xf32>
    %8 = vector.broadcast %7 : vector<128x1xf32> to vector<128x128xf32>
    %9 = arith.subf %1, %8 : vector<128x128xf32>
    %10 = arith.mulf %9, %9 : vector<128x128xf32>
    %cst_6 = arith.constant dense<0.000000e+00> : vector<128xf32>
    %11 = vector.multi_reduction <add>, %10, %cst_6 [1] : vector<128x128xf32> to vector<128xf32>
    %12 = vector.shape_cast %11 : vector<128xf32> to vector<128x1xf32>
    %cst_7 = arith.constant 1.280000e+02 : f32
    %13 = vector.broadcast %cst_7 : f32 to vector<128x1xf32>
    %14 = arith.divf %12, %13 : vector<128x1xf32>
    %cst_8 = arith.constant 9.99999996E-13 : f32
    %15 = vector.broadcast %cst_8 : f32 to vector<128x1xf32>
    %16 = arith.addf %14, %15 : vector<128x1xf32>
    %17 = math.rsqrt %16 : vector<128x1xf32>
    %18 = vector.broadcast %17 : vector<128x1xf32> to vector<128x128xf32>
    %19 = arith.mulf %9, %18 : vector<128x128xf32>
    %20 = vector.broadcast %2 : vector<1x128xf32> to vector<128x128xf32>
    %21 = arith.mulf %19, %20 : vector<128x128xf32>
    %22 = vector.broadcast %3 : vector<1x128xf32> to vector<128x128xf32>
    %23 = arith.addf %21, %22 : vector<128x128xf32>
    %24 = arith.truncf %23 : vector<128x128xf32> to vector<128x128xbf16>
    %c0_9 = arith.constant 0 : index
    %c0_10 = arith.constant 0 : index
    %25 = vector.load %arg4[%c0_9, %c0_10] : memref<128x128xbf16, #tpu.memory_space<vmem>>, vector<128x128xbf16>
    tpu.vector_store %arg4[%c0_9, %c0_10], %24 {strides = array<i32>} : memref<128x128xbf16, #tpu.memory_space<vmem>>, vector<128x128xbf16>,
    return
  }
  func.func @transform_0(%arg0: i32) -> (i32, i32) {
    %c0_i32 = arith.constant 0 : i32
    %c0_i32_0 = arith.constant 0 : i32
    return %arg0, %c0_i32 : i32, i32
  }
  func.func @transform_1(%arg0: i32) -> (i32, i32) {
    %c0_i32 = arith.constant 0 : i32
    %c0_i32_0 = arith.constant 0 : i32
    %c0_i32_1 = arith.constant 0 : i32
    return %c0_i32, %c0_i32_0 : i32, i32
  }
  func.func @transform_2(%arg0: i32) -> (i32, i32) {
    %c0_i32 = arith.constant 0 : i32
    %c0_i32_0 = arith.constant 0 : i32
    %c0_i32_1 = arith.constant 0 : i32
    return %c0_i32, %c0_i32_0 : i32, i32
  }
  func.func @transform_3(%arg0: i32) -> (i32, i32) {
    %c0_i32 = arith.constant 0 : i32
    %c0_i32_0 = arith.constant 0 : i32
    return %arg0, %c0_i32 : i32, i32
  }
}

</mosaic_0001>

<llo_original>
// kernel: tpu_custom_call.1
$region0: #{tpu_custom_call.1}
  #allocation0 [shape = 'u32[]', space=smem, size = 0x4, offset = 0x4, fixed_abs, tag = 'smem constant byte address 0x4 - core index']
  #allocation1 [shape = 'u32[144,128]{1,0:T(1,128)}', space=vmem, size = 0x12000, scoped, tag = 'internal scratch']
  %s0 = inlined_call_operand.hbm [shape: bf16[256,128], index: 0, kind: input, shape index: {}]
  %s1 = inlined_call_operand.vmem [shape: f32[1,128], index: 1, kind: input, shape index: {}]
  %s2 = inlined_call_operand.vmem [shape: f32[1,128], index: 2, kind: input, shape index: {}]
  %s3 = inlined_call_operand.hbm [shape: bf16[256,128], index: 3, kind: output, shape index: {}]
  %s4 = sld [smem:[#allocation0]]
  $region49: #{tpu_custom_call.1} parent=0
    _
  %s6 = ssub.s32 1, %s4
  %s7 = scalar_select 0, %s6, %s4
  $region1: #{tpu_custom_call.1} parent=0
    #allocation2 [shape = 'u8[65536]{0}', space=vmem, size = 0x10000, scoped, tag = 'input window, operand 0']
    #allocation3 [shape = 's32[2]{0}', space=sflag, size = 0x8, scoped, tag = 'scoped memory for tpu_custom_call.1']
    #allocation4 [shape = 's32[2]{0}', space=sflag, size = 0x8, scoped, tag = 'scoped memory for tpu_custom_call.1']
    #allocation5 [shape = 'u8[65536]{0}', space=vmem, size = 0x10000, scoped, tag = 'output window, operand 0']
    %8 = vsyncpa [#allocation3], 0
    %s9 = scalar_lea.sflag [#allocation3], 1
    %10 = vsyncpa %s9, 0
    %11 = vsyncpa [#allocation4], 0
    %s12 = scalar_lea.sflag [#allocation4], 1
    %13 = vsyncpa %s12, 0
    loop: start=0, step=1, limit=4
    $region2: #{tpu_custom_call.1} parent=1 // loop_pre_header
      _
    $region3: #{tpu_custom_call.1} parent=1 // loop_header
      %s15 = sphi 0, %s19
      %p16 = scmp.ge.s32.totalorder %s15, 4
      %s25 = sphi 0, %s27
      %s28 = sphi 0, %s25
      %s29 = sphi 0, %s28
      %s45 = sphi 0, %s29
      %s49 = sphi 0, %s49
      %s51 = sphi 0, %s49
      %s52 = sphi 0, %s51
      %s66 = sphi 0, %s52
      %s70 = sphi 0, %s70
      %s72 = sphi 0, %s70
      %s73 = sphi 0, %s72
      %s87 = sphi 0, %s73
      %s93 = sphi 0, %s95
      %s96 = sphi 0, %s93
      %s97 = sphi 0, %s96
      %s113 = sphi 0, %s97
    $region4: #{tpu_custom_call.1} parent=1 // loop_header_branch
      %18 = sbr.rel (%p16) target = $region8
    $region5: #{tpu_custom_call.1} parent=1 // loop_body
      %s20 = ssub.s32 %s15, 1
      %s21 = ssub.s32 %s15, 2
      %s22 = sadd.s32 %s15, 1
      %s23 = ssub.s32 %s15, %s22
      %p24 = scmp.eq.s32.totalorder %s23, 0
      %s26 = sadd.s32 %s25, 1
      %s27 = scalar_select %p24, %s25, %s26
      %p30 = pneg %p24
      %p31 = scmp.eq.s32.totalorder %s15, 1
      %p32 = por %p30, %p31
      %p33 = scmp.ne.s32.totalorder %s25, %s28
      %p34 = scmp.eq.s32.totalorder %s15, 0
      %p35 = por %p33, %p34
      %p36 = scmp.ne.s32.totalorder %s25, %s28
      %p37 = scmp.eq.s32.totalorder %s20, 1
      %p38 = por %p36, %p37
      %p39 = scmp.ne.s32.totalorder %s28, %s29
      %p40 = scmp.eq.s32.totalorder %s20, 0
      %p41 = por %p39, %p40
      %p42 = scmp.ne.s32.totalorder %s28, %s29
      %p43 = scmp.eq.s32.totalorder %s21, 1
      %p44 = por %p42, %p43
      %p46 = scmp.ne.s32.totalorder %s29, %s45
      %p47 = scmp.eq.s32.totalorder %s21, 0
      %p48 = por %p46, %p47
      %s50 = sadd.s32 %s49, 1
      %p53 = scmp.eq.s32.totalorder %s15, 1
      %p54 = scmp.ne.s32.totalorder %s49, %s51
      %p55 = scmp.eq.s32.totalorder %s15, 0
      %p56 = por %p54, %p55
      %p57 = scmp.ne.s32.totalorder %s49, %s51
      %p58 = scmp.eq.s32.totalorder %s20, 1
      %p59 = por %p57, %p58
      %p60 = scmp.ne.s32.totalorder %s51, %s52
      %p61 = scmp.eq.s32.totalorder %s20, 0
      %p62 = por %p60, %p61
      %p63 = scmp.ne.s32.totalorder %s51, %s52
      %p64 = scmp.eq.s32.totalorder %s21, 1
      %p65 = por %p63, %p64
      %p67 = scmp.ne.s32.totalorder %s52, %s66
      %p68 = scmp.eq.s32.totalorder %s21, 0
      %p69 = por %p67, %p68
      %s71 = sadd.s32 %s70, 1
      %p74 = scmp.eq.s32.totalorder %s15, 1
      %p75 = scmp.ne.s32.totalorder %s70, %s72
      %p76 = scmp.eq.s32.totalorder %s15, 0
      %p77 = por %p75, %p76
      %p78 = scmp.ne.s32.totalorder %s70, %s72
      %p79 = scmp.eq.s32.totalorder %s20, 1
      %p80 = por %p78, %p79
      %p81 = scmp.ne.s32.totalorder %s72, %s73
      %p82 = scmp.eq.s32.totalorder %s20, 0
      %p83 = por %p81, %p82
      %p84 = scmp.ne.s32.totalorder %s72, %s73
      %p85 = scmp.eq.s32.totalorder %s21, 1
      %p86 = por %p84, %p85
      %p88 = scmp.ne.s32.totalorder %s73, %s87
      %p89 = scmp.eq.s32.totalorder %s21, 0
      %p90 = por %p88, %p89
      %s91 = ssub.s32 %s15, %s22
      %p92 = scmp.eq.s32.totalorder %s91, 0
      %s94 = sadd.s32 %s93, 1
      %s95 = scalar_select %p92, %s93, %s94
      %p98 = pneg %p92
      %p99 = scmp.eq.s32.totalorder %s15, 1
      %p100 = por %p98, %p99
      %p101 = scmp.ne.s32.totalorder %s93, %s96
      %p102 = scmp.eq.s32.totalorder %s15, 0
      %p103 = por %p101, %p102
      %p104 = scmp.ne.s32.totalorder %s93, %s96
      %p105 = scmp.eq.s32.totalorder %s20, 1
      %p106 = por %p104, %p105
      %p107 = scmp.ne.s32.totalorder %s96, %s97
      %p108 = scmp.eq.s32.totalorder %s20, 0
      %p109 = por %p107, %p108
      %p110 = scmp.ne.s32.totalorder %s96, %s97
      %p111 = scmp.eq.s32.totalorder %s21, 1
      %p112 = por %p110, %p111
      %p114 = scmp.ne.s32.totalorder %s97, %s113
      %p115 = scmp.eq.s32.totalorder %s21, 0
      %p116 = por %p114, %p115
      %p117 = scmp.le.s32.totalorder 1, %s15
      %p118 = scmp.lt.s32.totalorder %s15, 3
      %p119 = pnand %p117, %p118
      %p120 = pneg %p119
      // Predicated region
      $region9: #{tpu_custom_call.1} parent=5 // pred_check
        _
      $region10: #{tpu_custom_call.1} parent=5 // pred_check_branch
        %122 = sbr.rel (%p119) target = $region12
      $region11: #{tpu_custom_call.1} parent=5 // pred_region
        %s123 = ssub.s32 %s15, 1
        // Predicated region
        $region13: #{tpu_custom_call.1} parent=11 // pred_check
          %p124 = pneg %p62
        $region14: #{tpu_custom_call.1} parent=11 // pred_check_branch
          %126 = sbr.rel (%p124) target = $region16
        $region15: #{tpu_custom_call.1} parent=11 // pred_region
          _
        $region16: #{tpu_custom_call.1} parent=11 // pred_fallthru
          _
        // Predicated region
        $region17: #{tpu_custom_call.1} parent=11 // pred_check
          %p127 = pneg %p83
        $region18: #{tpu_custom_call.1} parent=11 // pred_check_branch
          %129 = sbr.rel (%p127) target = $region20
        $region19: #{tpu_custom_call.1} parent=11 // pred_region
          _
        $region20: #{tpu_custom_call.1} parent=11 // pred_fallthru
          _
      $region12: #{tpu_custom_call.1} parent=5 // pred_fallthru
        _
      %p130 = scmp.lt.s32.totalorder %s15, 2
      // Predicated region
      $region21: #{tpu_custom_call.1} parent=5 // pred_check
        %p131 = pneg %p130
      $region22: #{tpu_custom_call.1} parent=5 // pred_check_branch
        %133 = sbr.rel (%p131) target = $region24
      $region23: #{tpu_custom_call.1} parent=5 // pred_region
        // Predicated region
        $region25: #{tpu_custom_call.1} parent=23 // pred_check
          %p134 = pneg %p35
        $region26: #{tpu_custom_call.1} parent=23 // pred_check_branch
          %136 = sbr.rel (%p134) target = $region28
        $region27: #{tpu_custom_call.1} parent=23 // pred_region
          %s137 = sand.u32 %s25, 1
          %s138 = scalar_lea.sflag [#allocation3], %s137
          %s139 = sand.u32 %s25, 1
          %s140 = smul.addr %s139, 64
          %s141 = scalar_lea.vmem [#allocation2], %s140
          %s142 = smul.u32 16, %s15
          %s144 = ssub.s32 1024, 1024
          %145 = vsyncadd %s138, %s144
          %s146 = smul.addr %s142, 64
          %s147 = scalar_lea.hbm %s0, %s146
          %s148 = sshll.u32 %s141, 4
          %s149 = int_to_ptr.vmem [resolvable:$true] %s148
          %154 = dma.hbm_to_vmem [thread:$0]  %s147, 1024, %s149, %s138, 64, 64, 4
        $region28: #{tpu_custom_call.1} parent=23 // pred_fallthru
          _
      $region24: #{tpu_custom_call.1} parent=5 // pred_fallthru
        _
      %p155 = scmp.le.s32.totalorder 1, %s15
      %p156 = scmp.lt.s32.totalorder %s15, 3
      %p157 = pnand %p155, %p156
      %p158 = pneg %p157
      // Predicated region
      $region29: #{tpu_custom_call.1} parent=5 // pred_check
        _
      $region30: #{tpu_custom_call.1} parent=5 // pred_check_branch
        %160 = sbr.rel (%p157) target = $region32
      $region31: #{tpu_custom_call.1} parent=5 // pred_region
        %s161 = ssub.s32 %s15, 1
        %s162 = sand.u32 %s28, 1
        %s163 = scalar_lea.sflag [#allocation3], %s162
        %s164 = sand.u32 %s28, 1
        %s165 = smul.addr %s164, 64
        %s166 = scalar_lea.vmem [#allocation2], %s165
        // Predicated region
        $region33: #{tpu_custom_call.1} parent=31 // pred_check
          %p167 = pneg %p41
        $region34: #{tpu_custom_call.1} parent=31 // pred_check_branch
          %169 = sbr.rel (%p167) target = $region36
        $region35: #{tpu_custom_call.1} parent=31 // pred_region
          %170 = dma.done %s163, 1024
        $region36: #{tpu_custom_call.1} parent=31 // pred_fallthru
          _
        %s171 = sand.u32 %s28, 1
        %s172 = scalar_lea.sflag [#allocation3], %s171
        %s173 = sand.u32 %s28, 1
        %s174 = smul.addr %s173, 64
        %s175 = scalar_lea.vmem [#allocation2], %s174
        %p176 = pneg %p41
        %p177 = pneg %p38
        %p178 = pneg %p62
        %p179 = pneg %p59
        %p180 = pneg %p83
        %p181 = pneg %p80
        %p182 = pneg %p109
        %p183 = pneg %p106
        %s184 = sand.u32 %s96, 1
        %s185 = scalar_lea.sflag [#allocation4], %s184
        %s186 = sand.u32 %s96, 1
        %s187 = smul.addr %s186, 64
        %s188 = scalar_lea.vmem [#allocation5], %s187
        %s189 = smul.u32 16, %s20
        %s190 = smul.u32 16, %s20
        %v191 = vld [vmem:[%s166] sm:$0xf]
        %v192 = vld [vmem:[%s166 + $0x4] sm:$0xf]
        %v193 = vld [vmem:[%s166 + $0x8] sm:$0xf]
        %v194 = vld [vmem:[%s166 + $0xc] sm:$0xf]
        %v195 = vld [vmem:[%s166 + $0x10] sm:$0xf]
        %v196 = vld [vmem:[%s166 + $0x14] sm:$0xf]
        %v197 = vld [vmem:[%s166 + $0x18] sm:$0xf]
        %v198 = vld [vmem:[%s166 + $0x1c] sm:$0xf]
        %v199 = vld [vmem:[%s166 + $0x20] sm:$0xf]
        %v200 = vld [vmem:[%s166 + $0x24] sm:$0xf]
        %v201 = vld [vmem:[%s166 + $0x28] sm:$0xf]
        %v202 = vld [vmem:[%s166 + $0x2c] sm:$0xf]
        %v203 = vld [vmem:[%s166 + $0x30] sm:$0xf]
        %v204 = vld [vmem:[%s166 + $0x34] sm:$0xf]
        %v205 = vld [vmem:[%s166 + $0x38] sm:$0xf]
        %v206 = vld [vmem:[%s166 + $0x3c] sm:$0xf]
        %v207 = vunpack.c.l.bf16 %v191
        %v208 = vunpack.c.l.bf16 %v192
        %v209 = vunpack.c.l.bf16 %v193
        %v210 = vunpack.c.l.bf16 %v194
        %v211 = vunpack.c.l.bf16 %v195
        %v212 = vunpack.c.l.bf16 %v196
        %v213 = vunpack.c.l.bf16 %v197
        %v214 = vunpack.c.l.bf16 %v198
        %v215 = vunpack.c.l.bf16 %v199
        %v216 = vunpack.c.l.bf16 %v200
        %v217 = vunpack.c.l.bf16 %v201
        %v218 = vunpack.c.l.bf16 %v202
        %v219 = vunpack.c.l.bf16 %v203
        %v220 = vunpack.c.l.bf16 %v204
        %v221 = vunpack.c.l.bf16 %v205
        %v222 = vunpack.c.l.bf16 %v206
        %v223 = vld [vmem:[%s1] sm:$0x1]
        %v224 = vld [vmem:[%s2] sm:$0x1]
        %225 = vadd.xlane.f32.xlu0 %v207
        %v226 = vpop.xlane.xlu0 %225
        %227 = vadd.xlane.f32.xlu0 %v208
        %v228 = vpop.xlane.xlu0 %227
        %229 = vadd.xlane.f32.xlu0 %v209
        %v230 = vpop.xlane.xlu0 %229
        %231 = vadd.xlane.f32.xlu0 %v210
        %v232 = vpop.xlane.xlu0 %231
        %233 = vadd.xlane.f32.xlu0 %v211
        %v234 = vpop.xlane.xlu0 %233
        %235 = vadd.xlane.f32.xlu0 %v212
        %v236 = vpop.xlane.xlu0 %235
        %237 = vadd.xlane.f32.xlu0 %v213
        %v238 = vpop.xlane.xlu0 %237
        %239 = vadd.xlane.f32.xlu0 %v214
        %v240 = vpop.xlane.xlu0 %239
        %241 = vadd.xlane.f32.xlu0 %v215
        %v242 = vpop.xlane.xlu0 %241
        %243 = vadd.xlane.f32.xlu0 %v216
        %v244 = vpop.xlane.xlu0 %243
        %245 = vadd.xlane.f32.xlu0 %v217
        %v246 = vpop.xlane.xlu0 %245
        %247 = vadd.xlane.f32.xlu0 %v218
        %v248 = vpop.xlane.xlu0 %247
        %249 = vadd.xlane.f32.xlu0 %v219
        %v250 = vpop.xlane.xlu0 %249
        %251 = vadd.xlane.f32.xlu0 %v220
        %v252 = vpop.xlane.xlu0 %251
        %253 = vadd.xlane.f32.xlu0 %v221
        %v254 = vpop.xlane.xlu0 %253
        %255 = vadd.xlane.f32.xlu0 %v222
        %v256 = vpop.xlane.xlu0 %255
        %v257 = vrcp.pop 128.0
        %v258 = vmul.f32 %v226, %v257
        %v259 = vmul.f32 %v228, %v257
        %v260 = vmul.f32 %v230, %v257
        %v261 = vmul.f32 %v232, %v257
        %v262 = vmul.f32 %v234, %v257
        %v263 = vmul.f32 %v236, %v257
        %v264 = vmul.f32 %v238, %v257
        %v265 = vmul.f32 %v240, %v257
        %v266 = vmul.f32 %v242, %v257
        %v267 = vmul.f32 %v244, %v257
        %v268 = vmul.f32 %v246, %v257
        %v269 = vmul.f32 %v248, %v257
        %v270 = vmul.f32 %v250, %v257
        %v271 = vmul.f32 %v252, %v257
        %v272 = vmul.f32 %v254, %v257
        %v273 = vmul.f32 %v256, %v257
        %v274 = vsub.f32 %v207, %v258
        %v275 = vsub.f32 %v208, %v259
        %v276 = vsub.f32 %v209, %v260
        %v277 = vsub.f32 %v210, %v261
        %v278 = vsub.f32 %v211, %v262
        %v279 = vsub.f32 %v212, %v263
        %v280 = vsub.f32 %v213, %v264
        %v281 = vsub.f32 %v214, %v265
        %v282 = vsub.f32 %v215, %v266
        %v283 = vsub.f32 %v216, %v267
        %v284 = vsub.f32 %v217, %v268
        %v285 = vsub.f32 %v218, %v269
        %v286 = vsub.f32 %v219, %v270
        %v287 = vsub.f32 %v220, %v271
        %v288 = vsub.f32 %v221, %v272
        %v289 = vsub.f32 %v222, %v273
        %v290 = vmul.f32 %v274, %v274
        %v291 = vmul.f32 %v275, %v275
        %v292 = vmul.f32 %v276, %v276
        %v293 = vmul.f32 %v277, %v277
        %v294 = vmul.f32 %v278, %v278
        %v295 = vmul.f32 %v279, %v279
        %v296 = vmul.f32 %v280, %v280
        %v297 = vmul.f32 %v281, %v281
        %v298 = vmul.f32 %v282, %v282
        %v299 = vmul.f32 %v283, %v283
        %v300 = vmul.f32 %v284, %v284
        %v301 = vmul.f32 %v285, %v285
        %v302 = vmul.f32 %v286, %v286
        %v303 = vmul.f32 %v287, %v287
        %v304 = vmul.f32 %v288, %v288
        %v305 = vmul.f32 %v289, %v289
        %306 = vadd.xlane.f32.xlu0 %v290
        %v307 = vpop.xlane.xlu0 %306
        %308 = vadd.xlane.f32.xlu0 %v291
        %v309 = vpop.xlane.xlu0 %308
        %310 = vadd.xlane.f32.xlu0 %v292
        %v311 = vpop.xlane.xlu0 %310
        %312 = vadd.xlane.f32.xlu0 %v293
        %v313 = vpop.xlane.xlu0 %312
        %314 = vadd.xlane.f32.xlu0 %v294
        %v315 = vpop.xlane.xlu0 %314
        %316 = vadd.xlane.f32.xlu0 %v295
        %v317 = vpop.xlane.xlu0 %316
        %318 = vadd.xlane.f32.xlu0 %v296
        %v319 = vpop.xlane.xlu0 %318
        %320 = vadd.xlane.f32.xlu0 %v297
        %v321 = vpop.xlane.xlu0 %320
        %322 = vadd.xlane.f32.xlu0 %v298
        %v323 = vpop.xlane.xlu0 %322
        %324 = vadd.xlane.f32.xlu0 %v299
        %v325 = vpop.xlane.xlu0 %324
        %326 = vadd.xlane.f32.xlu0 %v300
        %v327 = vpop.xlane.xlu0 %326
        %328 = vadd.xlane.f32.xlu0 %v301
        %v329 = vpop.xlane.xlu0 %328
        %330 = vadd.xlane.f32.xlu0 %v302
        %v331 = vpop.xlane.xlu0 %330
        %332 = vadd.xlane.f32.xlu0 %v303
        %v333 = vpop.xlane.xlu0 %332
        %334 = vadd.xlane.f32.xlu0 %v304
        %v335 = vpop.xlane.xlu0 %334
        %336 = vadd.xlane.f32.xlu0 %v305
        %v337 = vpop.xlane.xlu0 %336
        %v338 = vmul.f32 %v307, %v257
        %v339 = vmul.f32 %v309, %v257
        %v340 = vmul.f32 %v311, %v257
        %v341 = vmul.f32 %v313, %v257
        %v342 = vmul.f32 %v315, %v257
        %v343 = vmul.f32 %v317, %v257
        %v344 = vmul.f32 %v319, %v257
        %v345 = vmul.f32 %v321, %v257
        %v346 = vmul.f32 %v323, %v257
        %v347 = vmul.f32 %v325, %v257
        %v348 = vmul.f32 %v327, %v257
        %v349 = vmul.f32 %v329, %v257
        %v350 = vmul.f32 %v331, %v257
        %v351 = vmul.f32 %v333, %v257
        %v352 = vmul.f32 %v335, %v257
        %v353 = vmul.f32 %v337, %v257
        %v354 = vadd.f32 %v338, 1e-12
        %v355 = vadd.f32 %v339, 1e-12
        %v356 = vadd.f32 %v340, 1e-12
        %v357 = vadd.f32 %v341, 1e-12
        %v358 = vadd.f32 %v342, 1e-12
        %v359 = vadd.f32 %v343, 1e-12
        %v360 = vadd.f32 %v344, 1e-12
        %v361 = vadd.f32 %v345, 1e-12
        %v362 = vadd.f32 %v346, 1e-12
        %v363 = vadd.f32 %v347, 1e-12
        %v364 = vadd.f32 %v348, 1e-12
        %v365 = vadd.f32 %v349, 1e-12
        %v366 = vadd.f32 %v350, 1e-12
        %v367 = vadd.f32 %v351, 1e-12
        %v368 = vadd.f32 %v352, 1e-12
        %v369 = vadd.f32 %v353, 1e-12
        %v370 = vrsqrt.pop %v354
        %v371 = vrsqrt.pop %v355
        %v372 = vrsqrt.pop %v356
        %v373 = vrsqrt.pop %v357
        %v374 = vrsqrt.pop %v358
        %v375 = vrsqrt.pop %v359
        %v376 = vrsqrt.pop %v360
        %v377 = vrsqrt.pop %v361
        %v378 = vrsqrt.pop %v362
        %v379 = vrsqrt.pop %v363
        %v380 = vrsqrt.pop %v364
        %v381 = vrsqrt.pop %v365
        %v382 = vrsqrt.pop %v366
        %v383 = vrsqrt.pop %v367
        %v384 = vrsqrt.pop %v368
        %v385 = vrsqrt.pop %v369
        %v386 = vmul.f32 %v274, %v370
        %v387 = vmul.f32 %v275, %v371
        %v388 = vmul.f32 %v276, %v372
        %v389 = vmul.f32 %v277, %v373
        %v390 = vmul.f32 %v278, %v374
        %v391 = vmul.f32 %v279, %v375
        %v392 = vmul.f32 %v280, %v376
        %v393 = vmul.f32 %v281, %v377
        %v394 = vmul.f32 %v282, %v378
        %v395 = vmul.f32 %v283, %v379
        %v396 = vmul.f32 %v284, %v380
        %v397 = vmul.f32 %v285, %v381
        %v398 = vmul.f32 %v286, %v382
        %v399 = vmul.f32 %v287, %v383
        %v400 = vmul.f32 %v288, %v384
        %v401 = vmul.f32 %v289, %v385
        %v403 = vlaneseq
        %v404 = vshrl.u32 %v403, 7
        %v405 = vsub.s32 0, %v404
        %v406 = vrot.slane %v223, %v405
        %v408 = vmul.f32 %v386, %v406
        %v409 = vmul.f32 %v387, %v406
        %v410 = vmul.f32 %v388, %v406
        %v411 = vmul.f32 %v389, %v406
        %v412 = vmul.f32 %v390, %v406
        %v413 = vmul.f32 %v391, %v406
        %v414 = vmul.f32 %v392, %v406
        %v415 = vmul.f32 %v393, %v406
        %v416 = vmul.f32 %v394, %v406
        %v417 = vmul.f32 %v395, %v406
        %v418 = vmul.f32 %v396, %v406
        %v419 = vmul.f32 %v397, %v406
        %v420 = vmul.f32 %v398, %v406
        %v421 = vmul.f32 %v399, %v406
        %v422 = vmul.f32 %v400, %v406
        %v423 = vmul.f32 %v401, %v406
        %v425 = vlaneseq
        %v426 = vshrl.u32 %v425, 7
        %v427 = vsub.s32 0, %v426
        %v428 = vrot.slane %v224, %v427
        %v430 = vadd.f32 %v408, %v428
        %v431 = vadd.f32 %v409, %v428
        %v432 = vadd.f32 %v410, %v428
        %v433 = vadd.f32 %v411, %v428
        %v434 = vadd.f32 %v412, %v428
        %v435 = vadd.f32 %v413, %v428
        %v436 = vadd.f32 %v414, %v428
        %v437 = vadd.f32 %v415, %v428
        %v438 = vadd.f32 %v416, %v428
        %v439 = vadd.f32 %v417, %v428
        %v440 = vadd.f32 %v418, %v428
        %v441 = vadd.f32 %v419, %v428
        %v442 = vadd.f32 %v420, %v428
        %v443 = vadd.f32 %v421, %v428
        %v444 = vadd.f32 %v422, %v428
        %v445 = vadd.f32 %v423, %v428
        %v446 = vpack.c.bf16 %v431, %v430
        %v447 = vpack.c.bf16 %v433, %v432
        %v448 = vpack.c.bf16 %v435, %v434
        %v449 = vpack.c.bf16 %v437, %v436
        %v450 = vpack.c.bf16 %v439, %v438
        %v451 = vpack.c.bf16 %v441, %v440
        %v452 = vpack.c.bf16 %v443, %v442
        %v453 = vpack.c.bf16 %v445, %v444
        %v462 = vunpack.c.l.b16 %v446
        %v463 = vunpack.c.h.b16 %v446
        %v464 = vunpack.c.l.b16 %v447
        %v465 = vunpack.c.h.b16 %v447
        %v466 = vunpack.c.l.b16 %v448
        %v467 = vunpack.c.h.b16 %v448
        %v468 = vunpack.c.l.b16 %v449
        %v469 = vunpack.c.h.b16 %v449
        %v470 = vunpack.c.l.b16 %v450
        %v471 = vunpack.c.h.b16 %v450
        %v472 = vunpack.c.l.b16 %v451
        %v473 = vunpack.c.h.b16 %v451
        %v474 = vunpack.c.l.b16 %v452
        %v475 = vunpack.c.h.b16 %v452
        %v476 = vunpack.c.l.b16 %v453
        %v477 = vunpack.c.h.b16 %v453
        %v478 = vpack.c.b16 %v462, %v462
        %v479 = vpack.c.b16 %v463, %v463
        %v480 = vpack.c.b16 %v464, %v464
        %v481 = vpack.c.b16 %v465, %v465
        %v482 = vpack.c.b16 %v466, %v466
        %v483 = vpack.c.b16 %v467, %v467
        %v484 = vpack.c.b16 %v468, %v468
        %v485 = vpack.c.b16 %v469, %v469
        %v486 = vpack.c.b16 %v470, %v470
        %v487 = vpack.c.b16 %v471, %v471
        %v488 = vpack.c.b16 %v472, %v472
        %v489 = vpack.c.b16 %v473, %v473
        %v490 = vpack.c.b16 %v474, %v474
        %v491 = vpack.c.b16 %v475, %v475
        %v492 = vpack.c.b16 %v476, %v476
        %v493 = vpack.c.b16 %v477, %v477
        %510 = vst [vmem:[%s188] sm:$0xf] %v478
        %511 = vst [vmem:[%s188 + $0x4] sm:$0xf] %v479
        %512 = vst [vmem:[%s188 + $0x8] sm:$0xf] %v480
        %513 = vst [vmem:[%s188 + $0xc] sm:$0xf] %v481
        %514 = vst [vmem:[%s188 + $0x10] sm:$0xf] %v482
        %515 = vst [vmem:[%s188 + $0x14] sm:$0xf] %v483
        %516 = vst [vmem:[%s188 + $0x18] sm:$0xf] %v484
        %517 = vst [vmem:[%s188 + $0x1c] sm:$0xf] %v485
        %518 = vst [vmem:[%s188 + $0x20] sm:$0xf] %v486
        %519 = vst [vmem:[%s188 + $0x24] sm:$0xf] %v487
        %520 = vst [vmem:[%s188 + $0x28] sm:$0xf] %v488
        %521 = vst [vmem:[%s188 + $0x2c] sm:$0xf] %v489
        %522 = vst [vmem:[%s188 + $0x30] sm:$0xf] %v490
        %523 = vst [vmem:[%s188 + $0x34] sm:$0xf] %v491
        %524 = vst [vmem:[%s188 + $0x38] sm:$0xf] %v492
        %525 = vst [vmem:[%s188 + $0x3c] sm:$0xf] %v493
        %s526 = sand.u32 %s96, 1
        %s527 = scalar_lea.sflag [#allocation4], %s526
        %s528 = sand.u32 %s96, 1
        %s529 = smul.addr %s528, 64
        %s530 = scalar_lea.vmem [#allocation5], %s529
        // Predicated region
        $region37: #{tpu_custom_call.1} parent=31 // pred_check
          %p531 = pneg %p106
        $region38: #{tpu_custom_call.1} parent=31 // pred_check_branch
          %533 = sbr.rel (%p531) target = $region40
        $region39: #{tpu_custom_call.1} parent=31 // pred_region
          %s534 = smul.u32 16, %s20
          %s536 = ssub.s32 1024, 1024
          %537 = vsyncadd %s527, %s536
          %s538 = smul.addr %s534, 64
          %s539 = scalar_lea.hbm %s3, %s538
          %s540 = sshll.u32 %s530, 4
          %s541 = int_to_ptr.vmem [resolvable:$true] %s540
          %546 = dma.vmem_to_hbm [thread:$0]  %s541, 1024, %s539, %s527, 64, 64, 4
        $region40: #{tpu_custom_call.1} parent=31 // pred_fallthru
          _
      $region32: #{tpu_custom_call.1} parent=5 // pred_fallthru
        _
      %p547 = scmp.le.s32.totalorder 2, %s15
      // Predicated region
      $region41: #{tpu_custom_call.1} parent=5 // pred_check
        %p548 = pneg %p547
      $region42: #{tpu_custom_call.1} parent=5 // pred_check_branch
        %550 = sbr.rel (%p548) target = $region44
      $region43: #{tpu_custom_call.1} parent=5 // pred_region
        %s551 = ssub.s32 %s15, 2
        // Predicated region
        $region45: #{tpu_custom_call.1} parent=43 // pred_check
          %p552 = pneg %p112
        $region46: #{tpu_custom_call.1} parent=43 // pred_check_branch
          %554 = sbr.rel (%p552) target = $region48
        $region47: #{tpu_custom_call.1} parent=43 // pred_region
          %s555 = sand.u32 %s97, 1
          %s556 = scalar_lea.sflag [#allocation4], %s555
          %s557 = sand.u32 %s97, 1
          %s558 = smul.addr %s557, 64
          %s559 = scalar_lea.vmem [#allocation5], %s558
          %560 = dma.done %s556, 1024
        $region48: #{tpu_custom_call.1} parent=43 // pred_fallthru
          _
      $region44: #{tpu_custom_call.1} parent=5 // pred_fallthru
        _
    $region6: #{tpu_custom_call.1} parent=1 // loop_footer
      %s19 = sadd.s32 1, %s15
    $region7: #{tpu_custom_call.1} parent=1 // loop_footer_branch
      %14 = sbr.rel target = $region3
    $region8: #{tpu_custom_call.1} parent=1 // loop_exit
      _
    %561 = vsyncpa [#allocation3], 1
    %s562 = scalar_lea.sflag [#allocation3], 1
    %563 = vsyncpa %s562, 1
    %564 = vsyncpa [#allocation4], 1
    %s565 = scalar_lea.sflag [#allocation4], 1
    %566 = vsyncpa %s565, 1

</llo_original>
